<compile_context>
chip_gen: v5e
topology: v5e:2x2
jax: 0.10.0
libtpu: 0.0.40
codegen_flags: <defaults>
</compile_context>

<pallas_src>
import functools

import jax
import jax.numpy as jnp
import numpy as np
from jax.experimental import pallas as pl
from jax.experimental.pallas import tpu as pltpu


# ----------------------------------------------------------------------------
# Tiling helpers
# ----------------------------------------------------------------------------

def _pick_tile(dim, target, align):
    """Largest divisor of `dim` that is <= target and a multiple of `align`
    (falls back to the full dim, which is always a legal block extent)."""
    if dim <= target:
        return dim
    t = (target // align) * align
    while t >= align:
        if dim % t == 0:
            return t
        t -= align
    return dim


# ----------------------------------------------------------------------------
# Fused linear kernels.
#   nk == 1 path : [optional LayerNorm] -> x @ W (+ b) -> [quick-GELU]
#                  -> [+ residual] -> store  (no accumulator scratch).
#   nk >  1 path : f32 VMEM accumulator over the K grid axis, epilogue at the
#                  last K step.  bf16 MXU operands everywhere, f32 accumulation.
# ----------------------------------------------------------------------------

def _linear_nk1_kernel(*refs, activation, has_ln, has_res, has_bias,
                       cache_ln, eps):
    it = iter(refs)
    x_ref = next(it)
    w_ref = next(it)
    b_ref = next(it) if has_bias else None
    g_ref = next(it) if has_ln else None
    be_ref = next(it) if has_ln else None
    r_ref = next(it) if has_res else None
    o_ref = next(it)
    xn_ref = next(it) if cache_ln else None     # bf16 [tm, K] LN cache

    def _normed():
        xf = x_ref[...].astype(jnp.float32)
        mu = jnp.mean(xf, axis=-1, keepdims=True)
        var = jnp.mean(jnp.square(xf - mu), axis=-1, keepdims=True)
        xn = (xf - mu) * jax.lax.rsqrt(var + eps)
        xn = xn * g_ref[...].astype(jnp.float32) + be_ref[...].astype(jnp.float32)
        return xn.astype(jnp.bfloat16)

    if has_ln:
        if cache_ln:
            # Normalize once per row tile (j == 0), reuse for the other j.
            @pl.when(pl.program_id(1) == 0)
            def _():
                xn_ref[...] = _normed()
            xb = xn_ref[...]
        else:
            xb = _normed()
    else:
        xb = x_ref[...].astype(jnp.bfloat16)

    y = jnp.dot(xb, w_ref[...].astype(jnp.bfloat16),
                preferred_element_type=jnp.float32)
    if has_bias:
        y = y + b_ref[...].astype(jnp.float32)
    if activation == "quick_gelu":
        y = y * jax.nn.sigmoid(1.702 * y)
    if has_res:
        y = y + r_ref[...].astype(jnp.float32)
    o_ref[...] = y.astype(o_ref.dtype)


def _linear_acc_kernel(*refs, nk, activation, has_res, has_bias):
    it = iter(refs)
    x_ref = next(it)
    w_ref = next(it)
    b_ref = next(it) if has_bias else None
    r_ref = next(it) if has_res else None
    o_ref = next(it)
    acc_ref = next(it)

    k = pl.program_id(2)

    @pl.when(k == 0)
    def _():
        acc_ref[...] = jnp.zeros_like(acc_ref)

    acc_ref[...] += jnp.dot(x_ref[...].astype(jnp.bfloat16),
                            w_ref[...].astype(jnp.bfloat16),
                            preferred_element_type=jnp.float32)

    @pl.when(k == nk - 1)
    def _():
        y = acc_ref[...]
        if has_bias:
            y = y + b_ref[...].astype(jnp.float32)
        if activation == "quick_gelu":
            y = y * jax.nn.sigmoid(1.702 * y)
        if has_res:
            y = y + r_ref[...].astype(jnp.float32)
        o_ref[...] = y.astype(o_ref.dtype)


def pallas_linear(x, w, b=None, *, activation=None, residual=None, ln=None,
                  eps=1e-5, out_dtype=jnp.bfloat16, tm=512, tn=512, tk=1024):
    """x: [M, K], w: [K, N] (stored bf16), b: [N] or None.  Optional fused
    LayerNorm(gamma, beta) prologue, quick-GELU epilogue and residual add."""
    M, K = x.shape
    Kw, N = w.shape
    assert K == Kw
    has_ln = ln is not None
    has_res = residual is not None
    has_bias = b is not None

    tn = _pick_tile(N, tn, 128)
    tk = K if has_ln else _pick_tile(K, tk, 128)   # LN needs the whole row
    nn, nk = N // tn, K // tk

    # Rows (M = B*S) can have awkward factors (S=50/257/577): use a cdiv grid
    # and let Pallas mask the partial edge block.  All row-wise ops, so OOB
    # rows never contaminate valid outputs.
    if M <= tm:
        tm, nm = M, 1
    else:
        tm = max(16, (tm // 16) * 16)
        nm = pl.cdiv(M, tm)

    w = w.astype(jnp.bfloat16)
    cache_ln = False

    if nk == 1:
        cache_ln = has_ln and nn > 1
        grid = (nm, nn)
        args = [x, w]
        in_specs = [pl.BlockSpec((tm, tk), lambda i, j: (i, 0)),
                    pl.BlockSpec((tk, tn), lambda i, j: (0, j))]
        if has_bias:
            args.append(b.reshape(1, N).astype(jnp.float32))
            in_specs.append(pl.BlockSpec((1, tn), lambda i, j: (0, j)))
        if has_ln:
            g, be = ln
            args += [g.reshape(1, K).astype(jnp.float32),
                     be.reshape(1, K).astype(jnp.float32)]
            in_specs += [pl.BlockSpec((1, K), lambda i, j: (0, 0)),
                         pl.BlockSpec((1, K), lambda i, j: (0, 0))]
        if has_res:
            args.append(residual)
            in_specs.append(pl.BlockSpec((tm, tn), lambda i, j: (i, j)))
        scratch = [pltpu.VMEM((tm, K), jnp.bfloat16)] if cache_ln else []
        kernel = functools.partial(_linear_nk1_kernel, activation=activation,
                                   has_ln=has_ln, has_res=has_res,
                                   has_bias=has_bias, cache_ln=cache_ln, eps=eps)
        out_spec = pl.BlockSpec((tm, tn), lambda i, j: (i, j))
        # j must run sequentially per core when the LN cache is reused across j.
        dims = ("parallel", "arbitrary" if cache_ln else "parallel")
    else:
        assert not has_ln
        grid = (nm, nn, nk)
        args = [x, w]
        in_specs = [pl.BlockSpec((tm, tk), lambda i, j, k: (i, k)),
                    pl.BlockSpec((tk, tn), lambda i, j, k: (k, j))]
        if has_bias:
            args.append(b.reshape(1, N).astype(jnp.float32))
            in_specs.append(pl.BlockSpec((1, tn), lambda i, j, k: (0, j)))
        if has_res:
            args.append(residual)
            in_specs.append(pl.BlockSpec((tm, tn), lambda i, j, k: (i, j)))
        scratch = [pltpu.VMEM((tm, tn), jnp.float32)]
        kernel = functools.partial(_linear_acc_kernel, nk=nk,
                                   activation=activation, has_res=has_res,
                                   has_bias=has_bias)
        out_spec = pl.BlockSpec((tm, tn), lambda i, j, k: (i, j))
        dims = ("parallel", "parallel", "arbitrary")

    # VMEM budget from the actual double-buffered block footprint; cap well
    # under v7x's 64 MiB physical VMEM, never hard-code the full capacity.
    blk = tm * tk * jnp.dtype(x.dtype).itemsize + tk * tn * 2
    if has_bias:
        blk += tn * 4
    if has_ln:
        blk += 2 * K * 4
    if has_res:
        blk += tm * tn * jnp.dtype(residual.dtype).itemsize
    blk += tm * tn * jnp.dtype(out_dtype).itemsize
    est = 2 * blk + (tm * tn * 4 if nk > 1 else 0) + (tm * K * 2 if cache_ln else 0)
    vmem_limit = int(min(max(2 * est, 16 * 1024 * 1024), 48 * 1024 * 1024))

    return pl.pallas_call(
        kernel,
        out_shape=jax.ShapeDtypeStruct((M, N), out_dtype),
        grid=grid,
        in_specs=in_specs,
        out_specs=out_spec,
        scratch_shapes=scratch,
        compiler_params=pltpu.CompilerParams(
            dimension_semantics=dims, vmem_limit_bytes=vmem_limit),
    )(*args)


# ----------------------------------------------------------------------------
# Fused  (class-token concat + position embedding + pre-LayerNorm).
# Input: patch embeddings [B, Np, D]; output: normalized [B, S=Np+1, D] bf16.
# ----------------------------------------------------------------------------

def _embed_ln_kernel(xp_ref, cls_ref, pos_ref, g_ref, b_ref, o_ref, *, eps):
    g = g_ref[...].astype(jnp.float32)
    b = b_ref[...].astype(jnp.float32)
    pos = pos_ref[...].astype(jnp.float32)            # [S, D]

    def _ln(rows):                                     # row-wise LayerNorm
        mu = jnp.mean(rows, axis=-1, keepdims=True)
        var = jnp.mean(jnp.square(rows - mu), axis=-1, keepdims=True)
        return (rows - mu) * jax.lax.rsqrt(var + eps) * g + b

    cls_row = cls_ref[...].astype(jnp.float32) + pos[0:1, :]        # [1, D]
    rest = xp_ref[0].astype(jnp.float32) + pos[1:, :]               # [Np, D]
    o_ref[0, 0:1, :] = _ln(cls_row).astype(o_ref.dtype)
    o_ref[0, 1:, :] = _ln(rest).astype(o_ref.dtype)


def pallas_embed_ln(x_patch, class_emb, pos_emb, gamma, beta, eps=1e-5,
                    out_dtype=jnp.bfloat16):
    B, Np, D = x_patch.shape
    S = Np + 1
    return pl.pallas_call(
        functools.partial(_embed_ln_kernel, eps=eps),
        out_shape=jax.ShapeDtypeStruct((B, S, D), out_dtype),
        grid=(B,),
        in_specs=[pl.BlockSpec((1, Np, D), lambda bb: (bb, 0, 0)),
                  pl.BlockSpec((1, D), lambda bb: (0, 0)),
                  pl.BlockSpec((S, D), lambda bb: (0, 0)),
                  pl.BlockSpec((1, D), lambda bb: (0, 0)),
                  pl.BlockSpec((1, D), lambda bb: (0, 0))],
        out_specs=pl.BlockSpec((1, S, D), lambda bb: (bb, 0, 0)),
        compiler_params=pltpu.CompilerParams(dimension_semantics=("parallel",)),
    )(x_patch, class_emb.reshape(1, D), pos_emb, gamma.reshape(1, D),
      beta.reshape(1, D))


# ----------------------------------------------------------------------------
# Multi-head attention consuming the fused QKV tensor [B, S, 3D].
# Heads are ref-sliced out of the D axis; each head's output is stored
# directly into its lane slice of o_ref (no concatenate -> no vreg spill).
# ----------------------------------------------------------------------------

def _attention_kernel(qkv_ref, o_ref, *, heads, head_dim, scale):
    D = heads * head_dim
    for h in range(heads):                      # static unrolled head loop
        q = qkv_ref[0, :, pl.ds(h * head_dim, head_dim)].astype(jnp.bfloat16)
        k = qkv_ref[0, :, pl.ds(D + h * head_dim, head_dim)].astype(jnp.bfloat16)
        v = qkv_ref[0, :, pl.ds(2 * D + h * head_dim, head_dim)].astype(jnp.bfloat16)
        s = jax.lax.dot_general(q, k, (((1,), (1,)), ((), ())),
                                preferred_element_type=jnp.float32) * scale
        s = s - jnp.max(s, axis=-1, keepdims=True)
        p = jnp.exp(s)
        l = jnp.sum(p, axis=-1, keepdims=True)
        o = jnp.dot(p.astype(jnp.bfloat16), v,
                    preferred_element_type=jnp.float32)
        o = o / l                               # exact softmax normalization
        o_ref[0, :, pl.ds(h * head_dim, head_dim)] = o.astype(o_ref.dtype)


def pallas_attention(qkv, heads, head_dim, scale):
    """qkv: [B, S, 3*D] -> [B, S, D]."""
    B, S, threeD = qkv.shape
    D = heads * head_dim
    kernel = functools.partial(_attention_kernel, heads=heads,
                               head_dim=head_dim, scale=scale)
    return pl.pallas_call(
        kernel,
        out_shape=jax.ShapeDtypeStruct((B, S, D), qkv.dtype),
        grid=(B,),
        in_specs=[pl.BlockSpec((1, S, threeD), lambda b: (b, 0, 0))],
        out_specs=pl.BlockSpec((1, S, D), lambda b: (b, 0, 0)),
        compiler_params=pltpu.CompilerParams(dimension_semantics=("parallel",)),
    )(qkv)
    # TODO(synk): for v7x with B==1 and large S, add a head-group/query-tile
    # grid axis so both TensorCores get attention work (small share of FLOPs).


# ----------------------------------------------------------------------------
# CLIP vision transformer + visual projection (forward pass)
# ----------------------------------------------------------------------------

def clip_image_encoder(pixel_values, params, cfg):
    B, C, H, W = pixel_values.shape
    P, D, nh = cfg["patch"], cfg["hidden"], cfg["heads"]
    GH, GW = H // P, W // P
    Np = GH * GW
    S = Np + 1
    hd = D // nh
    scale = float(hd) ** -0.5

    # --- patch embedding (Conv2d stride=patch == patch extraction + matmul) ---
    px = pixel_values.astype(jnp.bfloat16)          # halve HBM traffic of transpose
    patches = px.reshape(B, C, GH, P, GW, P).transpose(0, 2, 4, 1, 3, 5)
    patches = patches.reshape(B * Np, C * P * P)
    xp = pallas_linear(patches, params["patch_w"]).reshape(B, Np, D)   # bf16

    # --- class token + position embedding + pre-LN fused in one pass ---
    x = pallas_embed_ln(xp, params["class_emb"], params["pos_emb"],
                        params["pre_ln_g"], params["pre_ln_b"])        # [B,S,D] bf16

    # --- transformer encoder layers (bf16 residual stream) ---
    for lyr in params["layers"]:
        h = x.reshape(B * S, D)
        qkv = pallas_linear(h, lyr["qkv_w"], lyr["qkv_b"],
                            ln=(lyr["ln1_g"], lyr["ln1_b"]))           # LN1 fused
        attn = pallas_attention(qkv.reshape(B, S, 3 * D), nh, hd, scale)
        x = pallas_linear(attn.reshape(B * S, D), lyr["o_w"], lyr["o_b"],
                          residual=h)                                  # o-proj + res

        h = x
        m = pallas_linear(h, lyr["fc1_w"], lyr["fc1_b"],
                          ln=(lyr["ln2_g"], lyr["ln2_b"]),
                          activation="quick_gelu")                     # LN2+FC1+GELU
        x = pallas_linear(m, lyr["fc2_w"], lyr["fc2_b"], residual=h)   # FC2 + res
        x = x.reshape(B, S, D)

    # --- pooler: CLS token -> post-LN + visual projection (fused, no bias) ---
    pooled = x[:, 0, :]
    out = pallas_linear(pooled, params["proj_w"], None,
                        ln=(params["post_ln_g"], params["post_ln_b"]),
                        out_dtype=jnp.float32)
    return out


# ----------------------------------------------------------------------------
# Pure-JAX f32 reference (same math, standard layout) for correctness checks.
# ----------------------------------------------------------------------------

def _ref_ln(x, g, b, eps=1e-5):
    mu = x.mean(-1, keepdims=True)
    var = ((x - mu) ** 2).mean(-1, keepdims=True)
    return (x - mu) * jax.lax.rsqrt(var + eps) * g + b


def clip_reference(pixel_values, params, cfg):
    B, C, H, W = pixel_values.shape
    P, D, nh = cfg["patch"], cfg["hidden"], cfg["heads"]
    GH, GW = H // P, W // P
    Np, S, hd = GH * GW, GH * GW + 1, D // nh
    scale = float(hd) ** -0.5
    f32 = lambda a: a.astype(jnp.float32)

    patches = pixel_values.reshape(B, C, GH, P, GW, P).transpose(0, 2, 4, 1, 3, 5)
    patches = patches.reshape(B * Np, C * P * P)
    x = (patches @ f32(params["patch_w"])).reshape(B, Np, D)
    cls = jnp.broadcast_to(params["class_emb"][None, None, :], (B, 1, D))
    x = jnp.concatenate([cls, x], axis=1) + params["pos_emb"][None]
    x = _ref_ln(x, params["pre_ln_g"], params["pre_ln_b"])
    for lyr in params["layers"]:
        h = x
        y = _ref_ln(x, lyr["ln1_g"], lyr["ln1_b"])
        qkv = y @ f32(lyr["qkv_w"]) + lyr["qkv_b"]
        q, k, v = jnp.split(qkv, 3, axis=-1)
        q = q.reshape(B, S, nh, hd).transpose(0, 2, 1, 3)
        k = k.reshape(B, S, nh, hd).transpose(0, 2, 1, 3)
        v = v.reshape(B, S, nh, hd).transpose(0, 2, 1, 3)
        p = jax.nn.softmax((q @ k.transpose(0, 1, 3, 2)) * scale, axis=-1)
        a = (p @ v).transpose(0, 2, 1, 3).reshape(B, S, D)
        x = h + a @ f32(lyr["o_w"]) + lyr["o_b"]
        h = x
        y = _ref_ln(x, lyr["ln2_g"], lyr["ln2_b"])
        m = y @ f32(lyr["fc1_w"]) + lyr["fc1_b"]
        m = m * jax.nn.sigmoid(1.702 * m)
        x = h + m @ f32(lyr["fc2_w"]) + lyr["fc2_b"]
    pooled = _ref_ln(x[:, 0, :], params["post_ln_g"], params["post_ln_b"])
    return pooled @ f32(params["proj_w"])


# ----------------------------------------------------------------------------
# Deterministic synthetic parameters (not a checkpoint load).
# ----------------------------------------------------------------------------
# TODO(synk): loading the real HF checkpoint (Conv2d [out,C,kh,kw] -> [C*kh*kw,out]
# flattening must match the patch-extraction order used above) is outside scope.

def init_params(key, cfg):
    P, C, D, I, proj, L = (cfg["patch"], cfg["channels"], cfg["hidden"],
                           cfg["intermediate"], cfg["proj"], cfg["layers"])
    S = (cfg["image"] // P) ** 2 + 1
    kit = iter(jax.random.split(key, 16 + 16 * L))

    def dense(din, dout):
        return (0.02 * jax.random.normal(next(kit), (din, dout), jnp.float32)
                ).astype(jnp.bfloat16)

    def vec(n, s=0.02):
        return s * jax.random.normal(next(kit), (n,), jnp.float32)

    def ln(n):
        return (1.0 + 0.05 * jax.random.normal(next(kit), (n,), jnp.float32),
                0.02 * jax.random.normal(next(kit), (n,), jnp.float32))

    pre_g, pre_b = ln(D)
    post_g, post_b = ln(D)
    params = {
        "patch_w": dense(C * P * P, D),
        "class_emb": vec(D),
        "pos_emb": 0.02 * jax.random.normal(next(kit), (S, D), jnp.float32),
        "pre_ln_g": pre_g, "pre_ln_b": pre_b,
        "post_ln_g": post_g, "post_ln_b": post_b,
        "proj_w": dense(D, proj),
        "layers": [],
    }
    for _ in range(L):
        g1, b1 = ln(D)
        g2, b2 = ln(D)
        params["layers"].append({
            "ln1_g": g1, "ln1_b": b1, "ln2_g": g2, "ln2_b": b2,
            "qkv_w": dense(D, 3 * D), "qkv_b": vec(3 * D),
            "o_w": dense(D, D), "o_b": vec(D),
            "fc1_w": dense(D, I), "fc1_b": vec(I),
            "fc2_w": dense(I, D), "fc2_b": vec(D),
        })
    return params


# ----------------------------------------------------------------------------
# Main
# ----------------------------------------------------------------------------

if __name__ == "__main__":
    # --- self-test 1: K-split accumulator path + masked edge M block ---------
    k0, k1, k2, k3 = jax.random.split(jax.random.PRNGKey(0), 4)
    xA = jax.random.normal(k0, (72, 256), jnp.float32)
    wA = (0.05 * jax.random.normal(k1, (256, 128), jnp.float32)).astype(jnp.bfloat16)
    bA = 0.05 * jax.random.normal(k2, (128,), jnp.float32)
    rA = jax.random.normal(k3, (72, 128), jnp.float32)
    outA = pallas_linear(xA, wA, bA, activation="quick_gelu", residual=rA,
                         tm=64, tn=128, tk=128)
    yA = xA.astype(jnp.bfloat16).astype(jnp.float32) @ wA.astype(jnp.float32) + bA
    yA = yA * jax.nn.sigmoid(1.702 * yA) + rA
    np.testing.assert_allclose(np.asarray(outA, np.float32), np.asarray(yA),
                               atol=2e-2, rtol=2e-2)

    # --- self-test 2: LN-fused path with cached normalization (nn > 1) -------
    k4, k5, k6 = jax.random.split(jax.random.PRNGKey(2), 3)
    xB = jax.random.normal(k4, (32, 128), jnp.float32)
    wB = (0.05 * jax.random.normal(k5, (128, 256), jnp.float32)).astype(jnp.bfloat16)
    bB = 0.05 * jax.random.normal(k6, (256,), jnp.float32)
    gB = jnp.linspace(0.8, 1.2, 128, dtype=jnp.float32)
    beB = jnp.linspace(-0.1, 0.1, 128, dtype=jnp.float32)
    outB = pallas_linear(xB, wB, bB, ln=(gB, beB), tn=128)
    yB = _ref_ln(xB, gB, beB) @ wB.astype(jnp.float32) + bB
    np.testing.assert_allclose(np.asarray(outB, np.float32), np.asarray(yB),
                               atol=2e-2, rtol=2e-2)

    # --- full CLIP image encoder at small shapes ------------------------------
    cfg = dict(image=16, patch=8, channels=3, hidden=32, heads=4,
               intermediate=64, layers=2, proj=16)
    pixel_values = jax.random.normal(
        jax.random.PRNGKey(0),
        (2, cfg["channels"], cfg["image"], cfg["image"]), jnp.float32)
    params = init_params(jax.random.PRNGKey(1), cfg)

    out = jax.block_until_ready(clip_image_encoder(pixel_values, params, cfg))
    assert out.shape == (2, cfg["proj"]) and out.dtype == jnp.float32

    ref = clip_reference(pixel_values, params, cfg)
    np.testing.assert_allclose(np.asarray(out), np.asarray(ref),
                               atol=4e-2, rtol=5e-2)
    print("KERNEL_OK")
</pallas_src>

<mosaic_0001>
module attributes {stable_mosaic.version = 11 : i64} {
  func.func @_linear_acc_kernel(%arg0: i32, %arg1: i32, %arg2: i32, %arg3: memref<64x128xf32, #tpu.memory_space<vmem>>, %arg4: memref<128x128xbf16, #tpu.memory_space<vmem>>, %arg5: memref<1x128xf32, #tpu.memory_space<vmem>>, %arg6: memref<64x128xf32, #tpu.memory_space<vmem>>, %arg7: memref<64x128xbf16, #tpu.memory_space<vmem>>, %arg8: memref<64x128xf32, #tpu.memory_space<vmem>>) attributes {dimension_semantics = [#tpu.dimension_semantics<parallel>, #tpu.dimension_semantics<parallel>, #tpu.dimension_semantics<arbitrary>], iteration_bounds = array<i64: 2, 1, 2>, scalar_prefetch = 0 : i64, scratch_operands = 1 : i64, tpu.core_type = #tpu.core_type<tc>, window_params = [{transform_indices = @transform_0, window_bounds = array<i64: 64, 128>}, {transform_indices = @transform_1, window_bounds = array<i64: 128, 128>}, {transform_indices = @transform_2, window_bounds = array<i64: 1, 128>}, {transform_indices = @transform_3, window_bounds = array<i64: 64, 128>}, {transform_indices = @transform_4, window_bounds = array<i64: 64, 128>}]} {
    %c0_i32 = arith.constant 0 : i32
    %0 = arith.cmpi eq, %arg2, %c0_i32 : i32
    %1 = arith.extui %0 : i1 to i32
    %c0_i32_0 = arith.constant 0 : i32
    %2 = arith.cmpi ne, %1, %c0_i32_0 : i32
    scf.if %2 {
      %cst_9 = arith.constant 0.000000e+00 : f32
      %13 = vector.broadcast %cst_9 : f32 to vector<64x128xf32>
      %c0_10 = arith.constant 0 : index
      %c0_11 = arith.constant 0 : index
      %14 = vector.load %arg8[%c0_10, %c0_11] : memref<64x128xf32, #tpu.memory_space<vmem>>, vector<64x128xf32>
      tpu.vector_store %arg8[%c0_10, %c0_11], %13 {strides = array<i32>} : memref<64x128xf32, #tpu.memory_space<vmem>>, vector<64x128xf32>,
    } else {
    }
    %c0 = arith.constant 0 : index
    %c0_1 = arith.constant 0 : index
    %3 = vector.load %arg8[%c0, %c0_1] : memref<64x128xf32, #tpu.memory_space<vmem>>, vector<64x128xf32>
    %c0_2 = arith.constant 0 : index
    %c0_3 = arith.constant 0 : index
    %4 = vector.load %arg3[%c0_2, %c0_3] : memref<64x128xf32, #tpu.memory_space<vmem>>, vector<64x128xf32>
    %5 = arith.truncf %4 : vector<64x128xf32> to vector<64x128xbf16>
    %c0_4 = arith.constant 0 : index
    %c0_5 = arith.constant 0 : index
    %6 = vector.load %arg4[%c0_4, %c0_5] : memref<128x128xbf16, #tpu.memory_space<vmem>>, vector<128x128xbf16>
    %cst = arith.constant dense<0.000000e+00> : vector<64x128xf32>
    %7 = tpu.matmul %5, %6, %cst {dimension_numbers = #tpu.dot_dimension_numbers<[1], [0], [0], [1], [0, 0, 1, 1], [], []>} : vector<64x128xbf16>, vector<128x128xbf16>, vector<64x128xf32> -> vector<64x128xf32>
    %8 = arith.addf %3, %7 : vector<64x128xf32>
    %c0_6 = arith.constant 0 : index
    %c0_7 = arith.constant 0 : index
    %9 = vector.load %arg8[%c0_6, %c0_7] : memref<64x128xf32, #tpu.memory_space<vmem>>, vector<64x128xf32>
    tpu.vector_store %arg8[%c0_6, %c0_7], %8 {strides = array<i32>} : memref<64x128xf32, #tpu.memory_space<vmem>>, vector<64x128xf32>,
    %c1_i32 = arith.constant 1 : i32
    %10 = arith.cmpi eq, %arg2, %c1_i32 : i32
    %11 = arith.extui %10 : i1 to i32
    %c0_i32_8 = arith.constant 0 : i32
    %12 = arith.cmpi ne, %11, %c0_i32_8 : i32
    scf.if %12 {
      %c0_9 = arith.constant 0 : index
      %c0_10 = arith.constant 0 : index
      %13 = vector.load %arg8[%c0_9, %c0_10] : memref<64x128xf32, #tpu.memory_space<vmem>>, vector<64x128xf32>
      %c0_11 = arith.constant 0 : index
      %c0_12 = arith.constant 0 : index
      %14 = vector.load %arg5[%c0_11, %c0_12] : memref<1x128xf32, #tpu.memory_space<vmem>>, vector<1x128xf32>
      %15 = vector.broadcast %14 : vector<1x128xf32> to vector<64x128xf32>
      %16 = arith.addf %13, %15 : vector<64x128xf32>
      %cst_13 = arith.constant 1.702000e+00 : f32
      %17 = vector.broadcast %cst_13 : f32 to vector<64x128xf32>
      %18 = arith.mulf %17, %16 : vector<64x128xf32>
      %19 = arith.negf %18 : vector<64x128xf32>
      %20 = math.exp %19 : vector<64x128xf32>
      %cst_14 = arith.constant 1.000000e+00 : f32
      %21 = vector.broadcast %cst_14 : f32 to vector<64x128xf32>
      %22 = arith.addf %21, %20 : vector<64x128xf32>
      %23 = arith.divf %21, %22 : vector<64x128xf32>
      %24 = arith.mulf %16, %23 : vector<64x128xf32>
      %c0_15 = arith.constant 0 : index
      %c0_16 = arith.constant 0 : index
      %25 = vector.load %arg6[%c0_15, %c0_16] : memref<64x128xf32, #tpu.memory_space<vmem>>, vector<64x128xf32>
      %26 = arith.addf %24, %25 : vector<64x128xf32>
      %27 = arith.truncf %26 : vector<64x128xf32> to vector<64x128xbf16>
      %c0_17 = arith.constant 0 : index
      %c0_18 = arith.constant 0 : index
      %28 = vector.load %arg7[%c0_17, %c0_18] : memref<64x128xbf16, #tpu.memory_space<vmem>>, vector<64x128xbf16>
      tpu.vector_store %arg7[%c0_17, %c0_18], %27 {strides = array<i32>} : memref<64x128xbf16, #tpu.memory_space<vmem>>, vector<64x128xbf16>,
    } else {
    }
    return
  }
  func.func @transform_0(%arg0: i32, %arg1: i32, %arg2: i32) -> (i32, i32) {
    %c0_i32 = arith.constant 0 : i32
    return %arg0, %arg2 : i32, i32
  }
  func.func @transform_1(%arg0: i32, %arg1: i32, %arg2: i32) -> (i32, i32) {
    %c0_i32 = arith.constant 0 : i32
    return %arg2, %arg1 : i32, i32
  }
  func.func @transform_2(%arg0: i32, %arg1: i32, %arg2: i32) -> (i32, i32) {
    %c0_i32 = arith.constant 0 : i32
    %c0_i32_0 = arith.constant 0 : i32
    return %c0_i32, %arg1 : i32, i32
  }
  func.func @transform_3(%arg0: i32, %arg1: i32, %arg2: i32) -> (i32, i32) {
    %c0_i32 = arith.constant 0 : i32
    return %arg0, %arg1 : i32, i32
  }
  func.func @transform_4(%arg0: i32, %arg1: i32, %arg2: i32) -> (i32, i32) {
    %c0_i32 = arith.constant 0 : i32
    return %arg0, %arg1 : i32, i32
  }
}

</mosaic_0001>

<llo_original>
// kernel: tpu_custom_call.1
$region0: #{tpu_custom_call.1}
  #allocation0 [shape = 'u32[]', space=smem, size = 0x4, offset = 0x4, fixed_abs, tag = 'smem constant byte address 0x4 - core index']
  #allocation1 [shape = 'u32[72,128]{1,0:T(1,128)}', space=vmem, size = 0x9000, scoped, tag = 'internal scratch']
  #allocation2 [shape = 'f32[64,128]{1,0:T(8,128)}', space=vmem, size = 0x8000, scoped, tag = 'scratch operand']
  %s0 = inlined_call_operand.hbm [shape: f32[72,256], index: 0, kind: input, shape index: {}]
  %s1 = inlined_call_operand.hbm [shape: bf16[256,128], index: 1, kind: input, shape index: {}]
  %s2 = inlined_call_operand.vmem [shape: f32[1,128], index: 2, kind: input, shape index: {}]
  %s3 = inlined_call_operand.hbm [shape: f32[72,128], index: 3, kind: input, shape index: {}]
  %s4 = inlined_call_operand.hbm [shape: bf16[72,128], index: 4, kind: output, shape index: {}]
  %s5 = sld [smem:[#allocation0]]
  $region69: #{tpu_custom_call.1} parent=0
    _
  %s7 = ssub.s32 1, %s5
  %s8 = scalar_select 0, %s7, %s5
  $region1: #{tpu_custom_call.1} parent=0
    #allocation3 [shape = 'u8[65536]{0}', space=vmem, size = 0x10000, scoped, tag = 'input window, operand 0']
    #allocation4 [shape = 's32[2]{0}', space=sflag, size = 0x8, scoped, tag = 'scoped memory for tpu_custom_call.1']
    #allocation5 [shape = 's32[2]{0}', space=sflag, size = 0x8, scoped, tag = 'scoped memory for tpu_custom_call.1']
    #allocation6 [shape = 'u8[65536]{0}', space=vmem, size = 0x10000, scoped, tag = 'input window, operand 1']
    #allocation7 [shape = 's32[2]{0}', space=sflag, size = 0x8, scoped, tag = 'scoped memory for tpu_custom_call.1']
    #allocation8 [shape = 'u8[65536]{0}', space=vmem, size = 0x10000, scoped, tag = 'input window, operand 3']
    #allocation9 [shape = 'u8[32768]{0}', space=vmem, size = 0x8000, scoped, tag = 'output window, operand 0']
    %9 = vsyncpa [#allocation4], 0
    %s10 = scalar_lea.sflag [#allocation4], 1
    %11 = vsyncpa %s10, 0
    %12 = vsyncpa [#allocation7], 0
    %s13 = scalar_lea.sflag [#allocation7], 1
    %14 = vsyncpa %s13, 0
    %15 = vsyncpa [#allocation5], 0
    %s16 = scalar_lea.sflag [#allocation5], 1
    %17 = vsyncpa %s16, 0
    loop: start=0, step=1, limit=6
    $region2: #{tpu_custom_call.1} parent=1 // loop_pre_header
      _
    $region3: #{tpu_custom_call.1} parent=1 // loop_header
      %s19 = sphi 0, %s23
      %p20 = scmp.ge.s32.totalorder %s19, 6
      %s26 = sphi 0, %s45
      %s27 = sphi 0, %s41
      %s28 = sphi 0, %s37
      %s29 = sphi 0, %s26
      %s30 = sphi 0, %s27
      %s31 = sphi 0, %s28
      %s32 = sphi 0, %s29
      %s33 = sphi 0, %s30
      %s34 = sphi 0, %s31
      %s50 = sphi 0, %s52
      %s53 = sphi 0, %s50
      %s54 = sphi 0, %s53
      %s70 = sphi 0, %s54
      %s78 = sphi 0, %s80
      %s81 = sphi 0, %s78
      %s82 = sphi 0, %s81
      %s98 = sphi 0, %s82
      %s104 = sphi 0, %s106
      %s107 = sphi 0, %s104
      %s108 = sphi 0, %s107
      %s124 = sphi 0, %s108
      %s132 = sphi 0, %s134
      %s135 = sphi 0, %s132
      %s136 = sphi 0, %s135
      %s152 = sphi 0, %s136
      %s160 = sphi 0, %s162
      %s163 = sphi 0, %s160
      %s164 = sphi 0, %s163
      %s180 = sphi 0, %s164
    $region4: #{tpu_custom_call.1} parent=1 // loop_header_branch
      %22 = sbr.rel (%p20) target = $region8
    $region5: #{tpu_custom_call.1} parent=1 // loop_body
      %s24 = ssub.s32 %s19, 1
      %s25 = ssub.s32 %s19, 2
      %s35 = sadd.s32 1, %s28
      %p36 = scmp.ge.s32.totalorder %s35, 2
      %s37 = scalar_select %p36, 0, %s35
      %s38 = sadd.s32 1, %s27
      %s39 = scalar_select %p36, %s38, %s27
      %p40 = scmp.ge.s32.totalorder %s39, 1
      %s41 = scalar_select %p40, 0, %s39
      %s42 = sadd.s32 1, %s26
      %s43 = scalar_select %p40, %s42, %s26
      %p44 = scmp.ge.s32.totalorder %s43, 2
      %s45 = scalar_select %p44, 0, %s43
      %s46 = ssub.s32 %s26, %s45
      %s47 = ssub.s32 %s28, %s37
      %s48 = sor.u32 %s46, %s47
      %p49 = scmp.eq.s32.totalorder %s48, 0
      %s51 = sadd.s32 %s50, 1
      %s52 = scalar_select %p49, %s50, %s51
      %p55 = pneg %p49
      %p56 = scmp.eq.s32.totalorder %s19, 3
      %p57 = por %p55, %p56
      %p58 = scmp.ne.s32.totalorder %s50, %s53
      %p59 = scmp.eq.s32.totalorder %s19, 0
      %p60 = por %p58, %p59
      %p61 = scmp.ne.s32.totalorder %s50, %s53
      %p62 = scmp.eq.s32.totalorder %s24, 3
      %p63 = por %p61, %p62
      %p64 = scmp.ne.s32.totalorder %s53, %s54
      %p65 = scmp.eq.s32.totalorder %s24, 0
      %p66 = por %p64, %p65
      %p67 = scmp.ne.s32.totalorder %s53, %s54
      %p68 = scmp.eq.s32.totalorder %s25, 3
      %p69 = por %p67, %p68
      %p71 = scmp.ne.s32.totalorder %s54, %s70
      %p72 = scmp.eq.s32.totalorder %s25, 0
      %p73 = por %p71, %p72
      %s74 = ssub.s32 %s28, %s37
      %s75 = ssub.s32 %s27, %s41
      %s76 = sor.u32 %s74, %s75
      %p77 = scmp.eq.s32.totalorder %s76, 0
      %s79 = sadd.s32 %s78, 1
      %s80 = scalar_select %p77, %s78, %s79
      %p83 = pneg %p77
      %p84 = scmp.eq.s32.totalorder %s19, 3
      %p85 = por %p83, %p84
      %p86 = scmp.ne.s32.totalorder %s78, %s81
      %p87 = scmp.eq.s32.totalorder %s19, 0
      %p88 = por %p86, %p87
      %p89 = scmp.ne.s32.totalorder %s78, %s81
      %p90 = scmp.eq.s32.totalorder %s24, 3
      %p91 = por %p89, %p90
      %p92 = scmp.ne.s32.totalorder %s81, %s82
      %p93 = scmp.eq.s32.totalorder %s24, 0
      %p94 = por %p92, %p93
      %p95 = scmp.ne.s32.totalorder %s81, %s82
      %p96 = scmp.eq.s32.totalorder %s25, 3
      %p97 = por %p95, %p96
      %p99 = scmp.ne.s32.totalorder %s82, %s98
      %p100 = scmp.eq.s32.totalorder %s25, 0
      %p101 = por %p99, %p100
      %s102 = ssub.s32 %s27, %s41
      %p103 = scmp.eq.s32.totalorder %s102, 0
      %s105 = sadd.s32 %s104, 1
      %s106 = scalar_select %p103, %s104, %s105
      %p109 = pneg %p103
      %p110 = scmp.eq.s32.totalorder %s19, 3
      %p111 = por %p109, %p110
      %p112 = scmp.ne.s32.totalorder %s104, %s107
      %p113 = scmp.eq.s32.totalorder %s19, 0
      %p114 = por %p112, %p113
      %p115 = scmp.ne.s32.totalorder %s104, %s107
      %p116 = scmp.eq.s32.totalorder %s24, 3
      %p117 = por %p115, %p116
      %p118 = scmp.ne.s32.totalorder %s107, %s108
      %p119 = scmp.eq.s32.totalorder %s24, 0
      %p120 = por %p118, %p119
      %p121 = scmp.ne.s32.totalorder %s107, %s108
      %p122 = scmp.eq.s32.totalorder %s25, 3
      %p123 = por %p121, %p122
      %p125 = scmp.ne.s32.totalorder %s108, %s124
      %p126 = scmp.eq.s32.totalorder %s25, 0
      %p127 = por %p125, %p126
      %s128 = ssub.s32 %s26, %s45
      %s129 = ssub.s32 %s27, %s41
      %s130 = sor.u32 %s128, %s129
      %p131 = scmp.eq.s32.totalorder %s130, 0
      %s133 = sadd.s32 %s132, 1
      %s134 = scalar_select %p131, %s132, %s133
      %p137 = pneg %p131
      %p138 = scmp.eq.s32.totalorder %s19, 3
      %p139 = por %p137, %p138
      %p140 = scmp.ne.s32.totalorder %s132, %s135
      %p141 = scmp.eq.s32.totalorder %s19, 0
      %p142 = por %p140, %p141
      %p143 = scmp.ne.s32.totalorder %s132, %s135
      %p144 = scmp.eq.s32.totalorder %s24, 3
      %p145 = por %p143, %p144
      %p146 = scmp.ne.s32.totalorder %s135, %s136
      %p147 = scmp.eq.s32.totalorder %s24, 0
      %p148 = por %p146, %p147
      %p149 = scmp.ne.s32.totalorder %s135, %s136
      %p150 = scmp.eq.s32.totalorder %s25, 3
      %p151 = por %p149, %p150
      %p153 = scmp.ne.s32.totalorder %s136, %s152
      %p154 = scmp.eq.s32.totalorder %s25, 0
      %p155 = por %p153, %p154
      %s156 = ssub.s32 %s26, %s45
      %s157 = ssub.s32 %s27, %s41
      %s158 = sor.u32 %s156, %s157
      %p159 = scmp.eq.s32.totalorder %s158, 0
      %s161 = sadd.s32 %s160, 1
      %s162 = scalar_select %p159, %s160, %s161
      %p165 = pneg %p159
      %p166 = scmp.eq.s32.totalorder %s19, 3
      %p167 = por %p165, %p166
      %p168 = scmp.ne.s32.totalorder %s160, %s163
      %p169 = scmp.eq.s32.totalorder %s19, 0
      %p170 = por %p168, %p169
      %p171 = scmp.ne.s32.totalorder %s160, %s163
      %p172 = scmp.eq.s32.totalorder %s24, 3
      %p173 = por %p171, %p172
      %p174 = scmp.ne.s32.totalorder %s163, %s164
      %p175 = scmp.eq.s32.totalorder %s24, 0
      %p176 = por %p174, %p175
      %p177 = scmp.ne.s32.totalorder %s163, %s164
      %p178 = scmp.eq.s32.totalorder %s25, 3
      %p179 = por %p177, %p178
      %p181 = scmp.ne.s32.totalorder %s164, %s180
      %p182 = scmp.eq.s32.totalorder %s25, 0
      %p183 = por %p181, %p182
      %p184 = scmp.le.s32.totalorder 1, %s19
      %p185 = scmp.lt.s32.totalorder %s19, 5
      %p186 = pnand %p184, %p185
      %p187 = pneg %p186
      // Predicated region
      $region9: #{tpu_custom_call.1} parent=5 // pred_check
        _
      $region10: #{tpu_custom_call.1} parent=5 // pred_check_branch
        %189 = sbr.rel (%p186) target = $region12
      $region11: #{tpu_custom_call.1} parent=5 // pred_region
        %s190 = ssub.s32 %s19, 1
        // Predicated region
        $region13: #{tpu_custom_call.1} parent=11 // pred_check
          %p191 = pneg %p120
        $region14: #{tpu_custom_call.1} parent=11 // pred_check_branch
          %193 = sbr.rel (%p191) target = $region16
        $region15: #{tpu_custom_call.1} parent=11 // pred_region
          %p194 = scmp.lt.s32.totalorder %s30, 0
          %s195 = scalar_select %p194, %s30, 0
          %s196 = scalar_lea.vmem %s2, %s195
        $region16: #{tpu_custom_call.1} parent=11 // pred_fallthru
          _
      $region12: #{tpu_custom_call.1} parent=5 // pred_fallthru
        _
      %p197 = scmp.lt.s32.totalorder %s19, 4
      // Predicated region
      $region17: #{tpu_custom_call.1} parent=5 // pred_check
        %p198 = pneg %p197
      $region18: #{tpu_custom_call.1} parent=5 // pred_check_branch
        %200 = sbr.rel (%p198) target = $region20
      $region19: #{tpu_custom_call.1} parent=5 // pred_region
        // Predicated region
        $region21: #{tpu_custom_call.1} parent=19 // pred_check
          %p201 = pneg %p60
        $region22: #{tpu_custom_call.1} parent=19 // pred_check_branch
          %203 = sbr.rel (%p201) target = $region24
        $region23: #{tpu_custom_call.1} parent=19 // pred_region
          %s204 = sand.u32 %s50, 1
          %s205 = scalar_lea.sflag [#allocation4], %s204
          %s206 = sand.u32 %s50, 1
          %s207 = smul.addr %s206, 64
          %s208 = scalar_lea.vmem [#allocation3], %s207
          %s209 = smul.u32 8, %s26
          %s210 = ssub.s32 9, %s209
          %p211 = scmp.lt.s32.totalorder %s210, 8
          %s212 = scalar_select %p211, %s210, 8
          %s213 = smul.u32 8, %s212
          %s214 = ssub.s32 64, %s213
          %s215 = sshll.u32 %s214, 4
          %216 = vsyncadd %s205, %s215
          %p217 = scmp.ne.s32.totalorder 0, %s213
          %s218 = smul.addr %s209, 2
          %s219 = sadd.s32 %s28, %s218
          %s220 = smul.addr %s219, 8
          %s221 = scalar_lea.hbm %s0, %s220
          %s222 = smul.u32 8, %s212
          %s223 = sshll.u32 %s221, 4
          %s224 = int_to_ptr.hbm [resolvable:$true] %s223
          %s225 = sshll.u32 %s208, 4
          %s226 = int_to_ptr.vmem [resolvable:$true] %s225
          %s227 = sshll.u32 %s222, 4
          %231 = dma.hbm_to_vmem [thread:$0]  (%p217), %s224, %s227, %s226, %s205, 256, 128, 8
        $region24: #{tpu_custom_call.1} parent=19 // pred_fallthru
          _
        // Predicated region
        $region25: #{tpu_custom_call.1} parent=19 // pred_check
          %p232 = pneg %p88
        $region26: #{tpu_custom_call.1} parent=19 // pred_check_branch
          %234 = sbr.rel (%p232) target = $region28
        $region27: #{tpu_custom_call.1} parent=19 // pred_region
          %s235 = sand.u32 %s19, 1
          %s236 = scalar_lea.sflag [#allocation7], %s235
          %s237 = sand.u32 %s78, 1
          %s238 = smul.addr %s237, 64
          %s239 = scalar_lea.vmem [#allocation6], %s238
          %s240 = smul.u32 16, %s28
          %242 = vsyncadd %s236, 0
          %s243 = sadd.s32 %s27, %s240
          %s244 = smul.addr %s243, 4
          %s245 = scalar_lea.hbm %s1, %s244
          %s246 = sshll.u32 %s245, 4
          %s247 = int_to_ptr.hbm [resolvable:$true] %s246
          %s248 = sshll.u32 %s239, 4
          %s249 = int_to_ptr.vmem [resolvable:$true] %s248
          %254 = dma.hbm_to_vmem [thread:$0]  %s247, 1024, %s249, %s236, 64, 64, 4
        $region28: #{tpu_custom_call.1} parent=19 // pred_fallthru
          _
        // Predicated region
        $region29: #{tpu_custom_call.1} parent=19 // pred_check
          %p255 = pneg %p142
        $region30: #{tpu_custom_call.1} parent=19 // pred_check_branch
          %257 = sbr.rel (%p255) target = $region32
        $region31: #{tpu_custom_call.1} parent=19 // pred_region
          %s258 = sand.u32 %s19, 1
          %s259 = scalar_lea.sflag [#allocation7], %s258
          %s260 = sand.u32 %s132, 1
          %s261 = smul.addr %s260, 64
          %s262 = scalar_lea.vmem [#allocation8], %s261
          %s263 = smul.u32 8, %s26
          %s264 = ssub.s32 9, %s263
          %p265 = scmp.lt.s32.totalorder %s264, 8
          %s266 = scalar_select %p265, %s264, 8
          %s267 = smul.u32 8, %s266
          %s268 = ssub.s32 64, %s267
          %s269 = sshll.u32 %s268, 4
          %270 = vsyncadd %s259, %s269
          %p271 = scmp.ne.s32.totalorder 0, %s267
          %s272 = sadd.s32 %s27, %s263
          %s273 = smul.addr %s272, 8
          %s274 = scalar_lea.hbm %s3, %s273
          %s275 = smul.u32 8, %s266
          %s276 = sshll.u32 %s274, 4
          %s277 = int_to_ptr.hbm [resolvable:$true] %s276
          %s278 = sshll.u32 %s262, 4
          %s279 = int_to_ptr.vmem [resolvable:$true] %s278
          %s280 = sshll.u32 %s275, 4
          %284 = dma.hbm_to_vmem [thread:$0]  (%p271), %s277, %s280, %s279, %s259, 128, 128, 8
        $region32: #{tpu_custom_call.1} parent=19 // pred_fallthru
          _
      $region20: #{tpu_custom_call.1} parent=5 // pred_fallthru
        _
      %p285 = scmp.le.s32.totalorder 1, %s19
      %p286 = scmp.lt.s32.totalorder %s19, 5
      %p287 = pnand %p285, %p286
      %p288 = pneg %p287
      // Predicated region
      $region33: #{tpu_custom_call.1} parent=5 // pred_check
        _
      $region34: #{tpu_custom_call.1} parent=5 // pred_check_branch
        %290 = sbr.rel (%p287) target = $region36
      $region35: #{tpu_custom_call.1} parent=5 // pred_region
        %s291 = ssub.s32 %s19, 1
        %s292 = sand.u32 %s53, 1
        %s293 = scalar_lea.sflag [#allocation4], %s292
        %s294 = sand.u32 %s53, 1
        %s295 = smul.addr %s294, 64
        %s296 = scalar_lea.vmem [#allocation3], %s295
        // Predicated region
        $region37: #{tpu_custom_call.1} parent=35 // pred_check
          %p297 = pneg %p66
        $region38: #{tpu_custom_call.1} parent=35 // pred_check_branch
          %299 = sbr.rel (%p297) target = $region40
        $region39: #{tpu_custom_call.1} parent=35 // pred_region
          %301 = dma.done %s293, 1024
        $region40: #{tpu_custom_call.1} parent=35 // pred_fallthru
          _
        %s302 = sand.u32 %s24, 1
        %s303 = scalar_lea.sflag [#allocation7], %s302
        %s304 = sand.u32 %s81, 1
        %s305 = smul.addr %s304, 64
        %s306 = scalar_lea.vmem [#allocation6], %s305
        // Predicated region
        $region41: #{tpu_custom_call.1} parent=35 // pred_check
          %p307 = pneg %p94
        $region42: #{tpu_custom_call.1} parent=35 // pred_check_branch
          %309 = sbr.rel (%p307) target = $region44
        $region43: #{tpu_custom_call.1} parent=35 // pred_region
          %311 = dma.done %s303, 1024
        $region44: #{tpu_custom_call.1} parent=35 // pred_fallthru
          _
        %s312 = sand.u32 %s24, 1
        %s313 = scalar_lea.sflag [#allocation7], %s312
        %s314 = sand.u32 %s135, 1
        %s315 = smul.addr %s314, 64
        %s316 = scalar_lea.vmem [#allocation8], %s315
        // Predicated region
        $region45: #{tpu_custom_call.1} parent=35 // pred_check
          %p317 = pneg %p148
        $region46: #{tpu_custom_call.1} parent=35 // pred_check_branch
          %319 = sbr.rel (%p317) target = $region48
        $region47: #{tpu_custom_call.1} parent=35 // pred_region
          %321 = dma.done %s313, 1024
        $region48: #{tpu_custom_call.1} parent=35 // pred_fallthru
          _
        %s322 = sand.u32 %s53, 1
        %s323 = scalar_lea.sflag [#allocation4], %s322
        %s324 = sand.u32 %s53, 1
        %s325 = smul.addr %s324, 64
        %s326 = scalar_lea.vmem [#allocation3], %s325
        %p327 = pneg %p66
        %p328 = pneg %p63
        %s329 = sand.u32 %s24, 1
        %s330 = scalar_lea.sflag [#allocation7], %s329
        %s331 = sand.u32 %s81, 1
        %s332 = smul.addr %s331, 64
        %s333 = scalar_lea.vmem [#allocation6], %s332
        %p334 = pneg %p94
        %p335 = pneg %p91
        %p336 = scmp.lt.s32.totalorder %s30, 0
        %s337 = scalar_select %p336, %s30, 0
        %s338 = scalar_lea.vmem %s2, %s337
        %p339 = pneg %p120
        %p340 = pneg %p117
        %s341 = sand.u32 %s24, 1
        %s342 = scalar_lea.sflag [#allocation7], %s341
        %s343 = sand.u32 %s135, 1
        %s344 = smul.addr %s343, 64
        %s345 = scalar_lea.vmem [#allocation8], %s344
        %p346 = pneg %p148
        %p347 = pneg %p145
        %p348 = pneg %p176
        %p349 = pneg %p173
        %s350 = sand.u32 %s163, 1
        %s351 = scalar_lea.sflag [#allocation5], %s350
        %s352 = sand.u32 %s163, 1
        %s353 = smul.addr %s352, 32
        %s354 = scalar_lea.vmem [#allocation9], %s353
        %s355 = smul.u32 8, %s29
        %s356 = ssub.s32 9, %s355
        %p357 = scmp.lt.s32.totalorder %s356, 8
        %s358 = scalar_select %p357, %s356, 8
        %s359 = smul.u32 8, %s358
        %s360 = smul.u32 16, %s31
        %p361 = scmp.lt.s32.totalorder %s30, 0
        %s362 = scalar_select %p361, %s30, 0
        %s363 = scalar_lea.vmem %s2, %s362
        %s364 = smul.u32 8, %s29
        %s365 = ssub.s32 9, %s364
        %p366 = scmp.lt.s32.totalorder %s365, 8
        %s367 = scalar_select %p366, %s365, 8
        %s368 = smul.u32 8, %s367
        %s369 = smul.u32 8, %s29
        %s370 = ssub.s32 9, %s369
        %p371 = scmp.lt.s32.totalorder %s370, 8
        %s372 = scalar_select %p371, %s370, 8
        %s373 = smul.u32 4, %s372
        %p374 = scmp.eq.s32.totalorder %s31, 0
        // Predicated region
        $region49: #{tpu_custom_call.1} parent=35 // pred_check
          %p375 = pneg %p374
        $region50: #{tpu_custom_call.1} parent=35 // pred_check_branch
          %377 = sbr.rel (%p375) target = $region52
        $region51: #{tpu_custom_call.1} parent=35 // pred_region
          %378 = vst [vmem:[#allocation2] sm:$0xff] 0.0
          %379 = vst [vmem:[#allocation2 + $0x8] sm:$0xff] 0.0
          %380 = vst [vmem:[#allocation2 + $0x10] sm:$0xff] 0.0
          %381 = vst [vmem:[#allocation2 + $0x18] sm:$0xff] 0.0
          %382 = vst [vmem:[#allocation2 + $0x20] sm:$0xff] 0.0
          %383 = vst [vmem:[#allocation2 + $0x28] sm:$0xff] 0.0
          %384 = vst [vmem:[#allocation2 + $0x30] sm:$0xff] 0.0
          %385 = vst [vmem:[#allocation2 + $0x38] sm:$0xff] 0.0
        $region52: #{tpu_custom_call.1} parent=35 // pred_fallthru
          _
        %v386 = vld [vmem:[#allocation2] sm:$0xff]
        %v387 = vld [vmem:[#allocation2 + $0x8] sm:$0xff]
        %v388 = vld [vmem:[#allocation2 + $0x10] sm:$0xff]
        %v389 = vld [vmem:[#allocation2 + $0x18] sm:$0xff]
        %v390 = vld [vmem:[#allocation2 + $0x20] sm:$0xff]
        %v391 = vld [vmem:[#allocation2 + $0x28] sm:$0xff]
        %v392 = vld [vmem:[#allocation2 + $0x30] sm:$0xff]
        %v393 = vld [vmem:[#allocation2 + $0x38] sm:$0xff]
        %v394 = vld [vmem:[%s296] sm:$0xff]
        %v395 = vld [vmem:[%s296 + $0x8] sm:$0xff]
        %v396 = vld [vmem:[%s296 + $0x10] sm:$0xff]
        %v397 = vld [vmem:[%s296 + $0x18] sm:$0xff]
        %v398 = vld [vmem:[%s296 + $0x20] sm:$0xff]
        %v399 = vld [vmem:[%s296 + $0x28] sm:$0xff]
        %v400 = vld [vmem:[%s296 + $0x30] sm:$0xff]
        %v401 = vld [vmem:[%s296 + $0x38] sm:$0xff]
        %v402 = vpack.c.bf16 %v395, %v394
        %v403 = vpack.c.bf16 %v397, %v396
        %v404 = vpack.c.bf16 %v399, %v398
        %v405 = vpack.c.bf16 %v401, %v400
        %v406 = vld [vmem:[%s306] sm:$0xf]
        %v407 = vld [vmem:[%s306 + $0x4] sm:$0xf]
        %v408 = vld [vmem:[%s306 + $0x8] sm:$0xf]
        %v409 = vld [vmem:[%s306 + $0xc] sm:$0xf]
        %v410 = vld [vmem:[%s306 + $0x10] sm:$0xf]
        %v411 = vld [vmem:[%s306 + $0x14] sm:$0xf]
        %v412 = vld [vmem:[%s306 + $0x18] sm:$0xf]
        %v413 = vld [vmem:[%s306 + $0x1c] sm:$0xf]
        %v414 = vld [vmem:[%s306 + $0x20] sm:$0xf]
        %v415 = vld [vmem:[%s306 + $0x24] sm:$0xf]
        %v416 = vld [vmem:[%s306 + $0x28] sm:$0xf]
        %v417 = vld [vmem:[%s306 + $0x2c] sm:$0xf]
        %v418 = vld [vmem:[%s306 + $0x30] sm:$0xf]
        %v419 = vld [vmem:[%s306 + $0x34] sm:$0xf]
        %v420 = vld [vmem:[%s306 + $0x38] sm:$0xf]
        %v421 = vld [vmem:[%s306 + $0x3c] sm:$0xf]
        %v438 = vunpack.c.l.b16 %v406
        %v439 = vunpack.c.l.b16 %v407
        %v440 = vunpack.c.l.b16 %v408
        %v441 = vunpack.c.l.b16 %v409
        %v442 = vunpack.c.l.b16 %v410
        %v443 = vunpack.c.l.b16 %v411
        %v444 = vunpack.c.l.b16 %v412
        %v445 = vunpack.c.l.b16 %v413
        %v446 = vunpack.c.l.b16 %v414
        %v447 = vunpack.c.l.b16 %v415
        %v448 = vunpack.c.l.b16 %v416
        %v449 = vunpack.c.l.b16 %v417
        %v450 = vunpack.c.l.b16 %v418
        %v451 = vunpack.c.l.b16 %v419
        %v452 = vunpack.c.l.b16 %v420
        %v453 = vunpack.c.l.b16 %v421
        %v454 = vpack.c.b16 %v439, %v438
        %v455 = vpack.c.b16 %v441, %v440
        %v456 = vpack.c.b16 %v443, %v442
        %v457 = vpack.c.b16 %v445, %v444
        %v458 = vpack.c.b16 %v447, %v446
        %v459 = vpack.c.b16 %v449, %v448
        %v460 = vpack.c.b16 %v451, %v450
        %v461 = vpack.c.b16 %v453, %v452
        %470 = vmatpush.bf16.msra.mxu0 %v461
        %471 = vmatpush.bf16.msra.mxu0 %v460
        %472 = vmatpush.bf16.msra.mxu0 %v459
        %473 = vmatpush.bf16.msra.mxu0 %v458
        %474 = vmatpush.bf16.msra.mxu0 %v457
        %475 = vmatpush.bf16.msra.mxu0 %v456
        %476 = vmatpush.bf16.msra.mxu0 %v455
        %477 = vmatpush.bf16.msra.mxu0 %v454
        %478 = vmatmul.bf16.gmra.mxu0 %v402
        %v479 = vpop.f32.mrf.mxu0
        %v480 = vadd.f32 0.0, %v479
        %v481 = vpop.f32.mrf.mxu0
        %v482 = vadd.f32 0.0, %v481
        %483 = vmatmul.bf16.gmra.mxu0 %v403
        %v484 = vpop.f32.mrf.mxu0
        %v485 = vadd.f32 0.0, %v484
        %v486 = vpop.f32.mrf.mxu0
        %v487 = vadd.f32 0.0, %v486
        %488 = vmatmul.bf16.gmra.mxu0 %v404
        %v489 = vpop.f32.mrf.mxu0
        %v490 = vadd.f32 0.0, %v489
        %v491 = vpop.f32.mrf.mxu0
        %v492 = vadd.f32 0.0, %v491
        %493 = vmatmul.bf16.gmra.mxu0 %v405
        %v494 = vpop.f32.mrf.mxu0
        %v495 = vadd.f32 0.0, %v494
        %v496 = vpop.f32.mrf.mxu0
        %v497 = vadd.f32 0.0, %v496
        %498 = vdwg.mxu0
        %v499 = vadd.f32 %v386, %v480
        %v500 = vadd.f32 %v387, %v482
        %v501 = vadd.f32 %v388, %v485
        %v502 = vadd.f32 %v389, %v487
        %v503 = vadd.f32 %v390, %v490
        %v504 = vadd.f32 %v391, %v492
        %v505 = vadd.f32 %v392, %v495
        %v506 = vadd.f32 %v393, %v497
        %507 = vst [vmem:[#allocation2] sm:$0xff] %v499
        %508 = vst [vmem:[#allocation2 + $0x8] sm:$0xff] %v500
        %509 = vst [vmem:[#allocation2 + $0x10] sm:$0xff] %v501
        %510 = vst [vmem:[#allocation2 + $0x18] sm:$0xff] %v502
        %511 = vst [vmem:[#allocation2 + $0x20] sm:$0xff] %v503
        %512 = vst [vmem:[#allocation2 + $0x28] sm:$0xff] %v504
        %513 = vst [vmem:[#allocation2 + $0x30] sm:$0xff] %v505
        %514 = vst [vmem:[#allocation2 + $0x38] sm:$0xff] %v506
        %p515 = scmp.eq.s32.totalorder %s31, 1
        // Predicated region
        $region53: #{tpu_custom_call.1} parent=35 // pred_check
          %p516 = pneg %p515
        $region54: #{tpu_custom_call.1} parent=35 // pred_check_branch
          %518 = sbr.rel (%p516) target = $region56
        $region55: #{tpu_custom_call.1} parent=35 // pred_region
          %v519 = vld [vmem:[#allocation2] sm:$0xff]
          %v520 = vld [vmem:[#allocation2 + $0x8] sm:$0xff]
          %v521 = vld [vmem:[#allocation2 + $0x10] sm:$0xff]
          %v522 = vld [vmem:[#allocation2 + $0x18] sm:$0xff]
          %v523 = vld [vmem:[#allocation2 + $0x20] sm:$0xff]
          %v524 = vld [vmem:[#allocation2 + $0x28] sm:$0xff]
          %v525 = vld [vmem:[#allocation2 + $0x30] sm:$0xff]
          %v526 = vld [vmem:[#allocation2 + $0x38] sm:$0xff]
          %v527 = vld [vmem:[%s363] sm:$0x1]
          %v529 = vperm.slane %v527, 0
          %v531 = vadd.f32 %v519, %v529
          %v532 = vadd.f32 %v520, %v529
          %v533 = vadd.f32 %v521, %v529
          %v534 = vadd.f32 %v522, %v529
          %v535 = vadd.f32 %v523, %v529
          %v536 = vadd.f32 %v524, %v529
          %v537 = vadd.f32 %v525, %v529
          %v538 = vadd.f32 %v526, %v529
          %v539 = vmul.f32 %v531, 1.702
          %v540 = vmul.f32 %v532, 1.702
          %v541 = vmul.f32 %v533, 1.702
          %v542 = vmul.f32 %v534, 1.702
          %v543 = vmul.f32 %v535, 1.702
          %v544 = vmul.f32 %v536, 1.702
          %v545 = vmul.f32 %v537, 1.702
          %v546 = vmul.f32 %v538, 1.702
          %v547 = vxor.u32 %v539, 2147483648
          %v548 = vxor.u32 %v540, 2147483648
          %v549 = vxor.u32 %v541, 2147483648
          %v550 = vxor.u32 %v542, 2147483648
          %v551 = vxor.u32 %v543, 2147483648
          %v552 = vxor.u32 %v544, 2147483648
          %v553 = vxor.u32 %v545, 2147483648
          %v554 = vxor.u32 %v546, 2147483648
          %v555 = vmul.f32 %v547, 1.442695
          %v556 = vpow.pop %v555
          %v557 = vmul.f32 %v548, 1.442695
          %v558 = vpow.pop %v557
          %v559 = vmul.f32 %v549, 1.442695
          %v560 = vpow.pop %v559
          %v561 = vmul.f32 %v550, 1.442695
          %v562 = vpow.pop %v561
          %v563 = vmul.f32 %v551, 1.442695
          %v564 = vpow.pop %v563
          %v565 = vmul.f32 %v552, 1.442695
          %v566 = vpow.pop %v565
          %v567 = vmul.f32 %v553, 1.442695
          %v568 = vpow.pop %v567
          %v569 = vmul.f32 %v554, 1.442695
          %v570 = vpow.pop %v569
          %v571 = vadd.f32 %v556, 1.0
          %v572 = vadd.f32 %v558, 1.0
          %v573 = vadd.f32 %v560, 1.0
          %v574 = vadd.f32 %v562, 1.0
          %v575 = vadd.f32 %v564, 1.0
          %v576 = vadd.f32 %v566, 1.0
          %v577 = vadd.f32 %v568, 1.0
          %v578 = vadd.f32 %v570, 1.0
          %v579 = vrcp.pop %v571
          %v580 = vmul.f32 %v571, %v579
          %v581 = vsub.f32 1.0, %v580
          %v582 = vmul.f32 %v579, %v581
          %v583 = vadd.f32 %v579, %v582
          %vm584 = vweird.f32 %v571
          %vm585 = vweird.f32 %v579
          %vm586 = vmor %vm584, %vm585
          %v587 = vsel %vm586, %v579, %v583
          %v588 = vand.u32 2147483647, %v571
          %vm589 = vcmp.eq.f32.partialorder %v588, 8.507059e+37
          %v590 = vand.u32 %v571, 2147483648
          %v591 = vor.u32 1.1754944e-38, %v590
          %v592 = vsel %vm589, %v591, %v587
          %v593 = vmul.f32 1.0, %v592
          %v594 = vrcp.pop %v572
          %v595 = vmul.f32 %v572, %v594
          %v596 = vsub.f32 1.0, %v595
          %v597 = vmul.f32 %v594, %v596
          %v598 = vadd.f32 %v594, %v597
          %vm599 = vweird.f32 %v572
          %vm600 = vweird.f32 %v594
          %vm601 = vmor %vm599, %vm600
          %v602 = vsel %vm601, %v594, %v598
          %v603 = vand.u32 2147483647, %v572
          %vm604 = vcmp.eq.f32.partialorder %v603, 8.507059e+37
          %v605 = vand.u32 %v572, 2147483648
          %v606 = vor.u32 1.1754944e-38, %v605
          %v607 = vsel %vm604, %v606, %v602
          %v608 = vmul.f32 1.0, %v607
          %v609 = vrcp.pop %v573
          %v610 = vmul.f32 %v573, %v609
          %v611 = vsub.f32 1.0, %v610
          %v612 = vmul.f32 %v609, %v611
          %v613 = vadd.f32 %v609, %v612
          %vm614 = vweird.f32 %v573
          %vm615 = vweird.f32 %v609
          %vm616 = vmor %vm614, %vm615
          %v617 = vsel %vm616, %v609, %v613
          %v618 = vand.u32 2147483647, %v573
          %vm619 = vcmp.eq.f32.partialorder %v618, 8.507059e+37
          %v620 = vand.u32 %v573, 2147483648
          %v621 = vor.u32 1.1754944e-38, %v620
          %v622 = vsel %vm619, %v621, %v617
          %v623 = vmul.f32 1.0, %v622
          %v624 = vrcp.pop %v574
          %v625 = vmul.f32 %v574, %v624
          %v626 = vsub.f32 1.0, %v625
          %v627 = vmul.f32 %v624, %v626
          %v628 = vadd.f32 %v624, %v627
          %vm629 = vweird.f32 %v574
          %vm630 = vweird.f32 %v624
          %vm631 = vmor %vm629, %vm630
          %v632 = vsel %vm631, %v624, %v628
          %v633 = vand.u32 2147483647, %v574
          %vm634 = vcmp.eq.f32.partialorder %v633, 8.507059e+37
          %v635 = vand.u32 %v574, 2147483648
          %v636 = vor.u32 1.1754944e-38, %v635
          %v637 = vsel %vm634, %v636, %v632
          %v638 = vmul.f32 1.0, %v637
          %v639 = vrcp.pop %v575
          %v640 = vmul.f32 %v575, %v639
          %v641 = vsub.f32 1.0, %v640
          %v642 = vmul.f32 %v639, %v641
          %v643 = vadd.f32 %v639, %v642
          %vm644 = vweird.f32 %v575
          %vm645 = vweird.f32 %v639
          %vm646 = vmor %vm644, %vm645
          %v647 = vsel %vm646, %v639, %v643
          %v648 = vand.u32 2147483647, %v575
          %vm649 = vcmp.eq.f32.partialorder %v648, 8.507059e+37
          %v650 = vand.u32 %v575, 2147483648
          %v651 = vor.u32 1.1754944e-38, %v650
          %v652 = vsel %vm649, %v651, %v647
          %v653 = vmul.f32 1.0, %v652
          %v654 = vrcp.pop %v576
          %v655 = vmul.f32 %v576, %v654
          %v656 = vsub.f32 1.0, %v655
          %v657 = vmul.f32 %v654, %v656
          %v658 = vadd.f32 %v654, %v657
          %vm659 = vweird.f32 %v576
          %vm660 = vweird.f32 %v654
          %vm661 = vmor %vm659, %vm660
          %v662 = vsel %vm661, %v654, %v658
          %v663 = vand.u32 2147483647, %v576
          %vm664 = vcmp.eq.f32.partialorder %v663, 8.507059e+37
          %v665 = vand.u32 %v576, 2147483648
          %v666 = vor.u32 1.1754944e-38, %v665
          %v667 = vsel %vm664, %v666, %v662
          %v668 = vmul.f32 1.0, %v667
          %v669 = vrcp.pop %v577
          %v670 = vmul.f32 %v577, %v669
          %v671 = vsub.f32 1.0, %v670
          %v672 = vmul.f32 %v669, %v671
          %v673 = vadd.f32 %v669, %v672
          %vm674 = vweird.f32 %v577
          %vm675 = vweird.f32 %v669
          %vm676 = vmor %vm674, %vm675
          %v677 = vsel %vm676, %v669, %v673
          %v678 = vand.u32 2147483647, %v577
          %vm679 = vcmp.eq.f32.partialorder %v678, 8.507059e+37
          %v680 = vand.u32 %v577, 2147483648
          %v681 = vor.u32 1.1754944e-38, %v680
          %v682 = vsel %vm679, %v681, %v677
          %v683 = vmul.f32 1.0, %v682
          %v684 = vrcp.pop %v578
          %v685 = vmul.f32 %v578, %v684
          %v686 = vsub.f32 1.0, %v685
          %v687 = vmul.f32 %v684, %v686
          %v688 = vadd.f32 %v684, %v687
          %vm689 = vweird.f32 %v578
          %vm690 = vweird.f32 %v684
          %vm691 = vmor %vm689, %vm690
          %v692 = vsel %vm691, %v684, %v688
          %v693 = vand.u32 2147483647, %v578
          %vm694 = vcmp.eq.f32.partialorder %v693, 8.507059e+37
          %v695 = vand.u32 %v578, 2147483648
          %v696 = vor.u32 1.1754944e-38, %v695
          %v697 = vsel %vm694, %v696, %v692
          %v698 = vmul.f32 1.0, %v697
          %v699 = vmul.f32 %v531, %v593
          %v700 = vmul.f32 %v532, %v608
          %v701 = vmul.f32 %v533, %v623
          %v702 = vmul.f32 %v534, %v638
          %v703 = vmul.f32 %v535, %v653
          %v704 = vmul.f32 %v536, %v668
          %v705 = vmul.f32 %v537, %v683
          %v706 = vmul.f32 %v538, %v698
          %v707 = vld [vmem:[%s316] sm:$0xff]
          %v708 = vld [vmem:[%s316 + $0x8] sm:$0xff]
          %v709 = vld [vmem:[%s316 + $0x10] sm:$0xff]
          %v710 = vld [vmem:[%s316 + $0x18] sm:$0xff]
          %v711 = vld [vmem:[%s316 + $0x20] sm:$0xff]
          %v712 = vld [vmem:[%s316 + $0x28] sm:$0xff]
          %v713 = vld [vmem:[%s316 + $0x30] sm:$0xff]
          %v714 = vld [vmem:[%s316 + $0x38] sm:$0xff]
          %v715 = vadd.f32 %v699, %v707
          %v716 = vadd.f32 %v700, %v708
          %v717 = vadd.f32 %v701, %v709
          %v718 = vadd.f32 %v702, %v710
          %v719 = vadd.f32 %v703, %v711
          %v720 = vadd.f32 %v704, %v712
          %v721 = vadd.f32 %v705, %v713
          %v722 = vadd.f32 %v706, %v714
          %v723 = vpack.c.bf16 %v715, %v715
          %v724 = vpack.c.bf16 %v716, %v716
          %v725 = vpack.c.bf16 %v717, %v717
          %v726 = vpack.c.bf16 %v718, %v718
          %v727 = vpack.c.bf16 %v719, %v719
          %v728 = vpack.c.bf16 %v720, %v720
          %v729 = vpack.c.bf16 %v721, %v721
          %v730 = vpack.c.bf16 %v722, %v722
          %731 = vst [vmem:[%s354] sm:$0xf] %v723
          %732 = vst [vmem:[%s354 + $0x4] sm:$0xf] %v724
          %733 = vst [vmem:[%s354 + $0x8] sm:$0xf] %v725
          %734 = vst [vmem:[%s354 + $0xc] sm:$0xf] %v726
          %735 = vst [vmem:[%s354 + $0x10] sm:$0xf] %v727
          %736 = vst [vmem:[%s354 + $0x14] sm:$0xf] %v728
          %737 = vst [vmem:[%s354 + $0x18] sm:$0xf] %v729
          %738 = vst [vmem:[%s354 + $0x1c] sm:$0xf] %v730
        $region56: #{tpu_custom_call.1} parent=35 // pred_fallthru
          _
        %s739 = sand.u32 %s163, 1
        %s740 = scalar_lea.sflag [#allocation5], %s739
        %s741 = sand.u32 %s163, 1
        %s742 = smul.addr %s741, 32
        %s743 = scalar_lea.vmem [#allocation9], %s742
        // Predicated region
        $region57: #{tpu_custom_call.1} parent=35 // pred_check
          %p744 = pneg %p173
        $region58: #{tpu_custom_call.1} parent=35 // pred_check_branch
          %746 = sbr.rel (%p744) target = $region60
        $region59: #{tpu_custom_call.1} parent=35 // pred_region
          %s747 = smul.u32 8, %s29
          %s748 = ssub.s32 9, %s747
          %p749 = scmp.lt.s32.totalorder %s748, 8
          %s750 = scalar_select %p749, %s748, 8
          %s751 = smul.u32 4, %s750
          %s752 = ssub.s32 32, %s751
          %s753 = sshll.u32 %s752, 4
          %754 = vsyncadd %s740, %s753
          %p755 = scmp.ne.s32.totalorder 0, %s751
          %s756 = sadd.s32 %s30, %s747
          %s757 = smul.addr %s756, 4
          %s758 = scalar_lea.hbm %s4, %s757
          %s759 = smul.u32 4, %s750
          %s760 = sshll.u32 %s743, 4
          %s761 = int_to_ptr.vmem [resolvable:$true] %s760
          %s762 = sshll.u32 %s758, 4
          %s763 = int_to_ptr.hbm [resolvable:$true] %s762
          %s764 = sshll.u32 %s759, 4
          %768 = dma.vmem_to_hbm [thread:$0]  (%p755), %s761, %s764, %s763, %s740, 64, 64, 4
        $region60: #{tpu_custom_call.1} parent=35 // pred_fallthru
          _
      $region36: #{tpu_custom_call.1} parent=5 // pred_fallthru
        _
      %p769 = scmp.le.s32.totalorder 2, %s19
      // Predicated region
      $region61: #{tpu_custom_call.1} parent=5 // pred_check
        %p770 = pneg %p769
      $region62: #{tpu_custom_call.1} parent=5 // pred_check_branch
        %772 = sbr.rel (%p770) target = $region64
      $region63: #{tpu_custom_call.1} parent=5 // pred_region
        %s773 = ssub.s32 %s19, 2
        // Predicated region
        $region65: #{tpu_custom_call.1} parent=63 // pred_check
          %p774 = pneg %p179
        $region66: #{tpu_custom_call.1} parent=63 // pred_check_branch
          %776 = sbr.rel (%p774) target = $region68
        $region67: #{tpu_custom_call.1} parent=63 // pred_region
          %s777 = sand.u32 %s164, 1
          %s778 = scalar_lea.sflag [#allocation5], %s777
          %s779 = sand.u32 %s164, 1
          %s780 = smul.addr %s779, 32
          %s781 = scalar_lea.vmem [#allocation9], %s780
          %783 = dma.done %s778, 512
        $region68: #{tpu_custom_call.1} parent=63 // pred_fallthru
          _
      $region64: #{tpu_custom_call.1} parent=5 // pred_fallthru
        _
    $region6: #{tpu_custom_call.1} parent=1 // loop_footer
      %s23 = sadd.s32 1, %s19
    $region7: #{tpu_custom_call.1} parent=1 // loop_footer_branch
      %18 = sbr.rel target = $region3
    $region8: #{tpu_custom_call.1} parent=1 // loop_exit
      _
    %784 = vsyncpa [#allocation4], 1
    %s785 = scalar_lea.sflag [#allocation4], 1
    %786 = vsyncpa %s785, 1
    %787 = vsyncpa [#allocation7], 1
    %s788 = scalar_lea.sflag [#allocation7], 1
    %789 = vsyncpa %s788, 1
    %790 = vsyncpa [#allocation5], 1
    %s791 = scalar_lea.sflag [#allocation5], 1
    %792 = vsyncpa %s791, 1

</llo_original>
